<compile_context>
chip_gen: v6e
topology: v6e:2x2x1
jax: 0.10.0
libtpu: 0.0.40
codegen_flags: <defaults>
</compile_context>

<pallas_src>
import functools

import numpy as np
import jax
import jax.numpy as jnp
from jax.experimental import pallas as pl
from jax.experimental.pallas import tpu as pltpu

EPSILON = float(jnp.finfo(jnp.float32).eps)   # == torch.finfo(torch.float32).eps

_LANE = 128
_MAX_T_TILE = 128


def _round_up(x, m):
    return ((x + m - 1) // m) * m


def hann_window(win_len):
    """Periodic Hann window (matches torch.hann_window default)."""
    n = np.arange(win_len, dtype=np.float64)
    return 0.5 - 0.5 * np.cos(2.0 * np.pi * n / win_len)


# ---------------------------------------------------------------------------
# Pallas kernel: fused ref/est STFT + compressed-magnitude loss partial sums
# ---------------------------------------------------------------------------
def _mag_loss_kernel(frames_ref, basis_ref, out_ref, *, use_l2):
    # frames_ref : (1, 2, T_TILE, N)  bf16   [ref tile ; est tile]
    # basis_ref  : (N, 2*F_PAD)       bf16   [win*cos | -win*sin], zero-padded
    # out_ref    : (1, 1, 8, 128)     f32    per-tile loss partial (broadcast)
    t_tile, n = frames_ref.shape[2], frames_ref.shape[3]

    # Single MXU call for (ref, est) x (cos, sin): (2*T, N) @ (N, 2*F_PAD).
    lhs = frames_ref[0].reshape(2 * t_tile, n)
    spec = jnp.dot(lhs, basis_ref[...], preferred_element_type=jnp.float32)

    f_pad = spec.shape[1] // 2
    re = spec[:, :f_pad]
    im = spec[:, f_pad:]
    power = re * re + im * im                                   # (2*T, F_PAD)

    # log1p(sqrt(clamp(power, eps)))  (log1p written as log(1 + x) for lowering)
    comp = jnp.log(1.0 + jnp.sqrt(jnp.maximum(power, EPSILON)))

    diff = comp[:t_tile, :] - comp[t_tile:, :]                  # ref - est
    err = diff * diff if use_l2 else jnp.abs(diff)

    out_ref[0, 0] = jnp.full((8, 128), jnp.sum(err), jnp.float32)


def _mag_partial_sums(frames, basis, t_tile, use_l2):
    """frames: (B, 2, T_pad, N) bf16; basis: (N, 2*F_pad) bf16 -> (B,) sums."""
    B, _, t_pad, n = frames.shape
    f2 = basis.shape[1]
    n_t = t_pad // t_tile
    kernel = functools.partial(_mag_loss_kernel, use_l2=use_l2)
    out = pl.pallas_call(
        kernel,
        out_shape=jax.ShapeDtypeStruct((B, n_t, 8, 128), jnp.float32),
        grid=(B, n_t),
        in_specs=[
            pl.BlockSpec((1, 2, t_tile, n), lambda b, t: (b, 0, t, 0)),
            # Constant basis: constant index_map -> DMA'd into VMEM only once.
            pl.BlockSpec((n, f2), lambda b, t: (0, 0)),
        ],
        out_specs=pl.BlockSpec((1, 1, 8, 128), lambda b, t: (b, t, 0, 0)),
        compiler_params=pltpu.CompilerParams(
            dimension_semantics=("parallel", "parallel"),
            vmem_limit_bytes=48 * 1024 * 1024,
        ),
    )(frames, basis)
    # Per-tile partial sums -> per-batch sums (tiny reduction, done in JAX).
    return jnp.sum(out[:, :, 0, 0], axis=1)


# ---------------------------------------------------------------------------
# Glue: window-folded fused DFT basis and torch.stft-compatible framing
# ---------------------------------------------------------------------------
def _make_fused_basis(fft_len, win_len, win_fn):
    """(N, 2*F_pad) bf16 basis: [win*cos | -win*sin], F padded to 128 lanes."""
    freq_bins = fft_len // 2 + 1
    f_pad = _round_up(freq_bins, _LANE)
    win = np.zeros(fft_len, np.float64)
    left = (fft_len - win_len) // 2            # torch.stft centers the window
    win[left:left + win_len] = np.asarray(win_fn(win_len), np.float64)
    n = np.arange(fft_len, dtype=np.float64)[:, None]
    k = np.arange(freq_bins, dtype=np.float64)[None, :]
    ang = 2.0 * np.pi * n * k / fft_len
    basis = np.zeros((fft_len, 2 * f_pad), np.float32)
    basis[:, :freq_bins] = win[:, None] * np.cos(ang)
    basis[:, f_pad:f_pad + freq_bins] = -win[:, None] * np.sin(ang)
    return jnp.asarray(basis, dtype=jnp.bfloat16)


def _frame_pair(ref_wav, est_wav, fft_len, hop, t_tile):
    """torch.stft(center=True, pad_mode='reflect') framing of ref & est stacked.

    Returns (B, 2, T_pad, N) bf16 frames, zero-padded along T to t_tile multiples
    (padded rows contribute exactly 0 to the loss).
    """
    B, L = ref_wav.shape
    both = jnp.stack([ref_wav, est_wav], axis=1).astype(jnp.bfloat16)   # (B,2,L)
    pad = fft_len // 2
    padded = jnp.pad(both, ((0, 0), (0, 0), (pad, pad)), mode="reflect")
    T = 1 + L // hop
    t_pad = _round_up(T, t_tile)
    idx = (np.arange(T)[:, None] * hop + np.arange(fft_len)[None, :]).astype(np.int32)
    frames = padded[:, :, idx]                                          # (B,2,T,N)
    # TODO(synk): replace this XLA gather with in-kernel waveform streaming.
    if t_pad > T:
        frames = jnp.pad(frames, ((0, 0), (0, 0), (0, t_pad - T), (0, 0)))
    return frames


# ---------------------------------------------------------------------------
# Module equivalent
# ---------------------------------------------------------------------------
class MagLoss:
    """log1p-compressed STFT magnitude loss (L1/L2), torch MagLoss equivalent."""

    def __init__(self, fft_len, win_inc, win_len, win_fn=hann_window, loss_tp="l2"):
        assert loss_tp in ("l1", "l2")
        self.fft_len = fft_len
        self.win_inc = win_inc
        self.win_len = win_len
        self.use_l2 = loss_tp == "l2"
        self.freq_bins = fft_len // 2 + 1
        self.basis = _make_fused_basis(fft_len, win_len, win_fn)   # (N, 2*F_pad) bf16
        # jit the whole framing + kernel + tile-sum pipeline (reduction-independent).
        self._per_batch_sums_jit = jax.jit(self._per_batch_sums)

    def _per_batch_sums(self, ref_wav, est_wav):
        _, L = ref_wav.shape
        T = 1 + L // self.win_inc
        t_tile = min(_MAX_T_TILE, _round_up(T, 16))
        frames = _frame_pair(ref_wav, est_wav, self.fft_len, self.win_inc, t_tile)
        return _mag_partial_sums(frames, self.basis, t_tile, self.use_l2)

    def __call__(self, ref_wav, est_wav, reduction="mean"):
        assert reduction in ("mean", "batch"), \
            "reduction can only be 'mean' or 'batch'"
        B, L = ref_wav.shape
        T = 1 + L // self.win_inc                 # true frame count (torch.stft)
        sums = self._per_batch_sums_jit(ref_wav, est_wav)      # (B,)
        denom = float(self.freq_bins * T)
        if reduction == "mean":
            return jnp.sum(sums) / (B * denom)
        return sums / denom                                     # (B,)

    def forward_res(self, lr_wav, ref_wav, est_wav, lr=8000, hr=16000, reduction="mean"):
        # TODO(synk): torchaudio.functional.resample (polyphase sinc resampling)
        # has no clean Pallas equivalent here; not implemented.
        raise NotImplementedError("forward_res requires an audio resampler")


# ---------------------------------------------------------------------------
if __name__ == "__main__":
    key = jax.random.PRNGKey(0)
    k1, k2 = jax.random.split(key)
    B, L = 2, 1024
    ref_wav = jax.random.normal(k1, (B, L), dtype=jnp.float32)
    est_wav = ref_wav + 0.1 * jax.random.normal(k2, (B, L), dtype=jnp.float32)

    # Small shapes consistent with the module (fft=256 -> F=129 padded to 256).
    loss_l2 = MagLoss(fft_len=256, win_inc=64, win_len=256,
                      win_fn=hann_window, loss_tp="l2")
    lm_mean = loss_l2(ref_wav, est_wav, reduction="mean")
    lm_batch = loss_l2(ref_wav, est_wav, reduction="batch")

    # Also exercise the L1 path with win_len < fft_len (window is zero-centered).
    loss_l1 = MagLoss(fft_len=256, win_inc=64, win_len=160,
                      win_fn=hann_window, loss_tp="l1")
    l1_mean = loss_l1(ref_wav, est_wav, reduction="mean")

    jax.block_until_ready((lm_mean, lm_batch, l1_mean))
    print("KERNEL_OK")
</pallas_src>

<mosaic_0001>
module attributes {stable_mosaic.version = 11 : i64} {
  func.func @_mag_loss_kernel(%arg0: i32, %arg1: i32, %arg2: memref<1x2x32x256xbf16, #tpu.memory_space<vmem>>, %arg3: memref<256x512xbf16, #tpu.memory_space<vmem>>, %arg4: memref<1x1x8x128xf32, #tpu.memory_space<vmem>>) attributes {dimension_semantics = [#tpu.dimension_semantics<parallel>, #tpu.dimension_semantics<parallel>], iteration_bounds = array<i64: 2, 1>, scalar_prefetch = 0 : i64, scratch_operands = 0 : i64, tpu.core_type = #tpu.core_type<tc>, window_params = [{transform_indices = @transform_0, window_bounds = array<i64: 1, 2, 32, 256>}, {pipeline_mode = #tpu.pipeline_mode<synchronous>, transform_indices = @transform_1, window_bounds = array<i64: 256, 512>}, {transform_indices = @transform_2, window_bounds = array<i64: 1, 1, 8, 128>}]} {
    %c0 = arith.constant 0 : index
    %c0_0 = arith.constant 0 : index
    %c0_1 = arith.constant 0 : index
    %c0_2 = arith.constant 0 : index
    %0 = vector.load %arg2[%c0, %c0_0, %c0_1, %c0_2] : memref<1x2x32x256xbf16, #tpu.memory_space<vmem>>, vector<1x2x32x256xbf16>
    %1 = vector.shape_cast %0 : vector<1x2x32x256xbf16> to vector<2x32x256xbf16>
    %2 = vector.shape_cast %1 : vector<2x32x256xbf16> to vector<64x256xbf16>
    %c0_3 = arith.constant 0 : index
    %c0_4 = arith.constant 0 : index
    %3 = vector.load %arg3[%c0_3, %c0_4] : memref<256x512xbf16, #tpu.memory_space<vmem>>, vector<256x512xbf16>
    %cst = arith.constant dense<0.000000e+00> : vector<64x512xf32>
    %4 = tpu.matmul %2, %3, %cst {dimension_numbers = #tpu.dot_dimension_numbers<[1], [0], [0], [1], [0, 0, 1, 1], [], []>} : vector<64x256xbf16>, vector<256x512xbf16>, vector<64x512xf32> -> vector<64x512xf32>
    %5 = vector.extract_strided_slice %4 {offsets = [0, 0], sizes = [64, 256], strides = [1, 1]} : vector<64x512xf32> to vector<64x256xf32>
    %6 = vector.extract_strided_slice %4 {offsets = [0, 256], sizes = [64, 256], strides = [1, 1]} : vector<64x512xf32> to vector<64x256xf32>
    %7 = arith.mulf %5, %5 : vector<64x256xf32>
    %8 = arith.mulf %6, %6 : vector<64x256xf32>
    %9 = arith.addf %7, %8 : vector<64x256xf32>
    %cst_5 = arith.constant 1.1920929E-7 : f32
    %10 = vector.broadcast %cst_5 : f32 to vector<64x256xf32>
    %11 = arith.maximumf %9, %10 : vector<64x256xf32>
    %12 = math.sqrt %11 : vector<64x256xf32>
    %cst_6 = arith.constant 1.000000e+00 : f32
    %13 = vector.broadcast %cst_6 : f32 to vector<64x256xf32>
    %14 = arith.addf %13, %12 : vector<64x256xf32>
    %15 = math.log %14 : vector<64x256xf32>
    %16 = vector.extract_strided_slice %15 {offsets = [0, 0], sizes = [32, 256], strides = [1, 1]} : vector<64x256xf32> to vector<32x256xf32>
    %17 = vector.extract_strided_slice %15 {offsets = [32, 0], sizes = [32, 256], strides = [1, 1]} : vector<64x256xf32> to vector<32x256xf32>
    %18 = arith.subf %16, %17 : vector<32x256xf32>
    %19 = arith.mulf %18, %18 : vector<32x256xf32>
    %20 = vector.shape_cast %19 : vector<32x256xf32> to vector<1x32x256xf32>
    %cst_7 = arith.constant dense<0.000000e+00> : vector<1xf32>
    %21 = vector.multi_reduction <add>, %20, %cst_7 [1, 2] : vector<1x32x256xf32> to vector<1xf32>
    %22 = vector.shape_cast %21 : vector<1xf32> to vector<1x1x1xf32>
    %23 = vector.extract %22[0, 0, 0] : f32 from vector<1x1x1xf32>
    %24 = vector.broadcast %23 : f32 to vector<8x128xf32>
    %c0_8 = arith.constant 0 : index
    %c0_9 = arith.constant 0 : index
    %c0_10 = arith.constant 0 : index
    %c0_11 = arith.constant 0 : index
    %25 = vector.load %arg4[%c0_8, %c0_9, %c0_10, %c0_11] : memref<1x1x8x128xf32, #tpu.memory_space<vmem>>, vector<1x1x8x128xf32>
    %26 = vector.shape_cast %25 : vector<1x1x8x128xf32> to vector<8x128xf32>
    %27 = vector.shape_cast %24 : vector<8x128xf32> to vector<1x1x8x128xf32>
    tpu.vector_store %arg4[%c0_8, %c0_9, %c0_10, %c0_11], %27 {strides = array<i32>} : memref<1x1x8x128xf32, #tpu.memory_space<vmem>>, vector<1x1x8x128xf32>,
    return
  }
  func.func @transform_0(%arg0: i32, %arg1: i32) -> (i32, i32, i32, i32) {
    %c0_i32 = arith.constant 0 : i32
    %c0_i32_0 = arith.constant 0 : i32
    %c0_i32_1 = arith.constant 0 : i32
    return %arg0, %c0_i32, %arg1, %c0_i32_0 : i32, i32, i32, i32
  }
  func.func @transform_1(%arg0: i32, %arg1: i32) -> (i32, i32) {
    %c0_i32 = arith.constant 0 : i32
    %c0_i32_0 = arith.constant 0 : i32
    %c0_i32_1 = arith.constant 0 : i32
    return %c0_i32, %c0_i32_0 : i32, i32
  }
  func.func @transform_2(%arg0: i32, %arg1: i32) -> (i32, i32, i32, i32) {
    %c0_i32 = arith.constant 0 : i32
    %c0_i32_0 = arith.constant 0 : i32
    %c0_i32_1 = arith.constant 0 : i32
    return %arg0, %arg1, %c0_i32, %c0_i32_0 : i32, i32, i32, i32
  }
}

</mosaic_0001>

<llo_original>
// kernel: _per_batch_sums.1
$region0: #{_per_batch_sums.1}
  #allocation0 [shape = 'u32[]', space=smem, size = 0x4, offset = 0x4, fixed_abs, tag = 'smem constant byte address 0x4 - core index']
  #allocation1 [shape = 'u32[144,128]{1,0:T(1,128)}', space=vmem, size = 0x12000, scoped, tag = 'internal scratch']
  %s0 = inlined_call_operand.vmem [shape: bf16[2,2,32,256], index: 0, kind: input, shape index: {}]
  %s1 = inlined_call_operand.vmem [shape: bf16[256,512], index: 1, kind: input, shape index: {}]
  %s2 = inlined_call_operand.vmem [shape: f32[2,1,8,128], index: 2, kind: output, shape index: {}]
  %s3 = sld [smem:[#allocation0]]
  $region41: #{_per_batch_sums.1} parent=0
    _
  %s5 = ssub.s32 1, %s3
  %s6 = scalar_select 0, %s5, %s3
  loop: start=0, step=1, limit=4
  $region2: #{_per_batch_sums.1} parent=0 // loop_pre_header
    _
  $region3: #{_per_batch_sums.1} parent=0 // loop_header
    %s8 = sphi 0, %s12
    %p9 = scmp.ge.s32.totalorder %s8, 4
    %s15 = sphi 0, %s27
    %s16 = sphi 0, %s23
    %s17 = sphi 0, %s15
    %s18 = sphi 0, %s16
    %s19 = sphi 0, %s17
    %s20 = sphi 0, %s18
    %s32 = sphi 0, %s34
    %s35 = sphi 0, %s32
    %s36 = sphi 0, %s35
    %s52 = sphi 0, %s36
    %s56 = sphi 0, %s56
    %s58 = sphi 0, %s56
    %s59 = sphi 0, %s58
    %s73 = sphi 0, %s59
    %s81 = sphi 0, %s83
    %s84 = sphi 0, %s81
    %s85 = sphi 0, %s84
    %s101 = sphi 0, %s85
  $region4: #{_per_batch_sums.1} parent=0 // loop_header_branch
    %11 = sbr.rel (%p9) target = $region8
  $region5: #{_per_batch_sums.1} parent=0 // loop_body
    %s13 = ssub.s32 %s8, 1
    %s14 = ssub.s32 %s8, 2
    %s21 = sadd.s32 1, %s16
    %p22 = scmp.ge.s32.totalorder %s21, 1
    %s23 = scalar_select %p22, 0, %s21
    %s24 = sadd.s32 1, %s15
    %s25 = scalar_select %p22, %s24, %s15
    %p26 = scmp.ge.s32.totalorder %s25, 2
    %s27 = scalar_select %p26, 0, %s25
    %s28 = ssub.s32 %s15, %s27
    %s29 = ssub.s32 %s16, %s23
    %s30 = sor.u32 %s28, %s29
    %p31 = scmp.eq.s32.totalorder %s30, 0
    %s33 = sadd.s32 %s32, 1
    %s34 = scalar_select %p31, %s32, %s33
    %p37 = pneg %p31
    %p38 = scmp.eq.s32.totalorder %s8, 1
    %p39 = por %p37, %p38
    %p40 = scmp.ne.s32.totalorder %s32, %s35
    %p41 = scmp.eq.s32.totalorder %s8, 0
    %p42 = por %p40, %p41
    %p43 = scmp.ne.s32.totalorder %s32, %s35
    %p44 = scmp.eq.s32.totalorder %s13, 1
    %p45 = por %p43, %p44
    %p46 = scmp.ne.s32.totalorder %s35, %s36
    %p47 = scmp.eq.s32.totalorder %s13, 0
    %p48 = por %p46, %p47
    %p49 = scmp.ne.s32.totalorder %s35, %s36
    %p50 = scmp.eq.s32.totalorder %s14, 1
    %p51 = por %p49, %p50
    %p53 = scmp.ne.s32.totalorder %s36, %s52
    %p54 = scmp.eq.s32.totalorder %s14, 0
    %p55 = por %p53, %p54
    %s57 = sadd.s32 %s56, 1
    %p60 = scmp.eq.s32.totalorder %s8, 1
    %p61 = scmp.ne.s32.totalorder %s56, %s58
    %p62 = scmp.eq.s32.totalorder %s8, 0
    %p63 = por %p61, %p62
    %p64 = scmp.ne.s32.totalorder %s56, %s58
    %p65 = scmp.eq.s32.totalorder %s13, 1
    %p66 = por %p64, %p65
    %p67 = scmp.ne.s32.totalorder %s58, %s59
    %p68 = scmp.eq.s32.totalorder %s13, 0
    %p69 = por %p67, %p68
    %p70 = scmp.ne.s32.totalorder %s58, %s59
    %p71 = scmp.eq.s32.totalorder %s14, 1
    %p72 = por %p70, %p71
    %p74 = scmp.ne.s32.totalorder %s59, %s73
    %p75 = scmp.eq.s32.totalorder %s14, 0
    %p76 = por %p74, %p75
    %s77 = ssub.s32 %s15, %s27
    %s78 = ssub.s32 %s16, %s23
    %s79 = sor.u32 %s77, %s78
    %p80 = scmp.eq.s32.totalorder %s79, 0
    %s82 = sadd.s32 %s81, 1
    %s83 = scalar_select %p80, %s81, %s82
    %p86 = pneg %p80
    %p87 = scmp.eq.s32.totalorder %s8, 1
    %p88 = por %p86, %p87
    %p89 = scmp.ne.s32.totalorder %s81, %s84
    %p90 = scmp.eq.s32.totalorder %s8, 0
    %p91 = por %p89, %p90
    %p92 = scmp.ne.s32.totalorder %s81, %s84
    %p93 = scmp.eq.s32.totalorder %s13, 1
    %p94 = por %p92, %p93
    %p95 = scmp.ne.s32.totalorder %s84, %s85
    %p96 = scmp.eq.s32.totalorder %s13, 0
    %p97 = por %p95, %p96
    %p98 = scmp.ne.s32.totalorder %s84, %s85
    %p99 = scmp.eq.s32.totalorder %s14, 1
    %p100 = por %p98, %p99
    %p102 = scmp.ne.s32.totalorder %s85, %s101
    %p103 = scmp.eq.s32.totalorder %s14, 0
    %p104 = por %p102, %p103
    %p105 = scmp.le.s32.totalorder 1, %s8
    %p106 = scmp.lt.s32.totalorder %s8, 3
    %p107 = pnand %p105, %p106
    %p108 = pneg %p107
    // Predicated region
    $region9: #{_per_batch_sums.1} parent=5 // pred_check
      _
    $region10: #{_per_batch_sums.1} parent=5 // pred_check_branch
      %110 = sbr.rel (%p107) target = $region12
    $region11: #{_per_batch_sums.1} parent=5 // pred_region
      %s111 = ssub.s32 %s8, 1
      // Predicated region
      $region13: #{_per_batch_sums.1} parent=11 // pred_check
        %p112 = pneg %p69
      $region14: #{_per_batch_sums.1} parent=11 // pred_check_branch
        %114 = sbr.rel (%p112) target = $region16
      $region15: #{_per_batch_sums.1} parent=11 // pred_region
        _
      $region16: #{_per_batch_sums.1} parent=11 // pred_fallthru
        _
    $region12: #{_per_batch_sums.1} parent=5 // pred_fallthru
      _
    %p115 = scmp.lt.s32.totalorder %s8, 2
    // Predicated region
    $region17: #{_per_batch_sums.1} parent=5 // pred_check
      %p116 = pneg %p115
    $region18: #{_per_batch_sums.1} parent=5 // pred_check_branch
      %118 = sbr.rel (%p116) target = $region20
    $region19: #{_per_batch_sums.1} parent=5 // pred_region
      // Predicated region
      $region21: #{_per_batch_sums.1} parent=19 // pred_check
        %p119 = pneg %p42
      $region22: #{_per_batch_sums.1} parent=19 // pred_check_branch
        %121 = sbr.rel (%p119) target = $region24
      $region23: #{_per_batch_sums.1} parent=19 // pred_region
        %s122 = smul.u32 4, %s16
        %p123 = scmp.lt.s32.totalorder %s15, 1
        %s124 = scalar_select %p123, %s15, 1
        %p125 = scmp.lt.s32.totalorder %s122, 3
        %s126 = scalar_select %p125, %s122, 3
        %s127 = smul.addr %s126, 2
        %s128 = smul.addr %s124, 16
        %s129 = sadd.s32 %s127, %s128
        %s130 = smul.addr %s129, 4
        %s131 = scalar_lea.vmem %s0, %s130
        %s132 = smul.u32 4, %s16
      $region24: #{_per_batch_sums.1} parent=19 // pred_fallthru
        _
    $region20: #{_per_batch_sums.1} parent=5 // pred_fallthru
      _
    %p133 = scmp.le.s32.totalorder 1, %s8
    %p134 = scmp.lt.s32.totalorder %s8, 3
    %p135 = pnand %p133, %p134
    %p136 = pneg %p135
    // Predicated region
    $region25: #{_per_batch_sums.1} parent=5 // pred_check
      _
    $region26: #{_per_batch_sums.1} parent=5 // pred_check_branch
      %138 = sbr.rel (%p135) target = $region28
    $region27: #{_per_batch_sums.1} parent=5 // pred_region
      %s139 = ssub.s32 %s8, 1
      %s140 = smul.u32 4, %s18
      %p141 = scmp.lt.s32.totalorder %s17, 1
      %s142 = scalar_select %p141, %s17, 1
      %p143 = scmp.lt.s32.totalorder %s140, 3
      %s144 = scalar_select %p143, %s140, 3
      %s145 = smul.addr %s144, 2
      %s146 = smul.addr %s142, 16
      %s147 = sadd.s32 %s145, %s146
      %s148 = smul.addr %s147, 4
      %s149 = scalar_lea.vmem %s0, %s148
      %p150 = pneg %p48
      %p151 = pneg %p45
      %p152 = pneg %p69
      %p153 = pneg %p66
      %p154 = pneg %p97
      %p155 = pneg %p94
      %p156 = scmp.lt.s32.totalorder %s17, 1
      %s157 = scalar_select %p156, %s17, 1
      %p158 = scmp.lt.s32.totalorder %s18, 0
      %s159 = scalar_select %p158, %s18, 0
      %s160 = sadd.s32 %s159, %s157
      %s161 = smul.addr %s160, 8
      %s162 = scalar_lea.vmem %s2, %s161
      %s163 = smul.u32 4, %s18
      %p164 = scmp.lt.s32.totalorder %s17, 1
      %s165 = scalar_select %p164, %s17, 1
      %p166 = scmp.lt.s32.totalorder %s163, 3
      %s167 = scalar_select %p166, %s163, 3
      %s168 = smul.addr %s167, 2
      %s169 = smul.addr %s165, 16
      %s170 = sadd.s32 %s168, %s169
      %s171 = smul.addr %s170, 4
      %s172 = scalar_lea.vmem %s0, %s171
      %s173 = smul.u32 4, %s18
      %p174 = scmp.lt.s32.totalorder %s17, 1
      %s175 = scalar_select %p174, %s17, 1
      %p176 = scmp.lt.s32.totalorder %s18, 0
      %s177 = scalar_select %p176, %s18, 0
      %s178 = sadd.s32 %s177, %s175
      %s179 = smul.addr %s178, 8
      %s180 = scalar_lea.vmem %s2, %s179
      %v181 = vld [vmem:[%s172] sm:$0xff]
      %v182 = vld [vmem:[%s172 + $0x8] sm:$0xff]
      %v183 = vld [vmem:[%s172 + $0x10] sm:$0xff]
      %v184 = vld [vmem:[%s172 + $0x18] sm:$0xff]
      %v185 = vld [vmem:[%s172 + $0x20] sm:$0xff]
      %v186 = vld [vmem:[%s172 + $0x28] sm:$0xff]
      %v187 = vld [vmem:[%s172 + $0x30] sm:$0xff]
      %v188 = vld [vmem:[%s172 + $0x38] sm:$0xff]
      %v189 = vld [vmem:[%s1] sm:$0xff]
      %v190 = vld [vmem:[%s1 + $0x8] sm:$0xff]
      %v191 = vld [vmem:[%s1 + $0x10] sm:$0xff]
      %v192 = vld [vmem:[%s1 + $0x18] sm:$0xff]
      %v193 = vld [vmem:[%s1 + $0x20] sm:$0xff]
      %v194 = vld [vmem:[%s1 + $0x28] sm:$0xff]
      %v195 = vld [vmem:[%s1 + $0x30] sm:$0xff]
      %v196 = vld [vmem:[%s1 + $0x38] sm:$0xff]
      %v197 = vld [vmem:[%s1 + $0x40] sm:$0xff]
      %v198 = vld [vmem:[%s1 + $0x48] sm:$0xff]
      %v199 = vld [vmem:[%s1 + $0x50] sm:$0xff]
      %v200 = vld [vmem:[%s1 + $0x58] sm:$0xff]
      %v201 = vld [vmem:[%s1 + $0x60] sm:$0xff]
      %v202 = vld [vmem:[%s1 + $0x68] sm:$0xff]
      %v203 = vld [vmem:[%s1 + $0x70] sm:$0xff]
      %v204 = vld [vmem:[%s1 + $0x78] sm:$0xff]
      %v205 = vld [vmem:[%s1 + $0x80] sm:$0xff]
      %v206 = vld [vmem:[%s1 + $0x88] sm:$0xff]
      %v207 = vld [vmem:[%s1 + $0x90] sm:$0xff]
      %v208 = vld [vmem:[%s1 + $0x98] sm:$0xff]
      %v209 = vld [vmem:[%s1 + $0xa0] sm:$0xff]
      %v210 = vld [vmem:[%s1 + $0xa8] sm:$0xff]
      %v211 = vld [vmem:[%s1 + $0xb0] sm:$0xff]
      %v212 = vld [vmem:[%s1 + $0xb8] sm:$0xff]
      %v213 = vld [vmem:[%s1 + $0xc0] sm:$0xff]
      %v214 = vld [vmem:[%s1 + $0xc8] sm:$0xff]
      %v215 = vld [vmem:[%s1 + $0xd0] sm:$0xff]
      %v216 = vld [vmem:[%s1 + $0xd8] sm:$0xff]
      %v217 = vld [vmem:[%s1 + $0xe0] sm:$0xff]
      %v218 = vld [vmem:[%s1 + $0xe8] sm:$0xff]
      %v219 = vld [vmem:[%s1 + $0xf0] sm:$0xff]
      %v220 = vld [vmem:[%s1 + $0xf8] sm:$0xff]
      %v221 = vld [vmem:[%s1 + $0x100] sm:$0xff]
      %v222 = vld [vmem:[%s1 + $0x108] sm:$0xff]
      %v223 = vld [vmem:[%s1 + $0x110] sm:$0xff]
      %v224 = vld [vmem:[%s1 + $0x118] sm:$0xff]
      %v225 = vld [vmem:[%s1 + $0x120] sm:$0xff]
      %v226 = vld [vmem:[%s1 + $0x128] sm:$0xff]
      %v227 = vld [vmem:[%s1 + $0x130] sm:$0xff]
      %v228 = vld [vmem:[%s1 + $0x138] sm:$0xff]
      %v229 = vld [vmem:[%s1 + $0x140] sm:$0xff]
      %v230 = vld [vmem:[%s1 + $0x148] sm:$0xff]
      %v231 = vld [vmem:[%s1 + $0x150] sm:$0xff]
      %v232 = vld [vmem:[%s1 + $0x158] sm:$0xff]
      %v233 = vld [vmem:[%s1 + $0x160] sm:$0xff]
      %v234 = vld [vmem:[%s1 + $0x168] sm:$0xff]
      %v235 = vld [vmem:[%s1 + $0x170] sm:$0xff]
      %v236 = vld [vmem:[%s1 + $0x178] sm:$0xff]
      %v237 = vld [vmem:[%s1 + $0x180] sm:$0xff]
      %v238 = vld [vmem:[%s1 + $0x188] sm:$0xff]
      %v239 = vld [vmem:[%s1 + $0x190] sm:$0xff]
      %v240 = vld [vmem:[%s1 + $0x198] sm:$0xff]
      %v241 = vld [vmem:[%s1 + $0x1a0] sm:$0xff]
      %v242 = vld [vmem:[%s1 + $0x1a8] sm:$0xff]
      %v243 = vld [vmem:[%s1 + $0x1b0] sm:$0xff]
      %v244 = vld [vmem:[%s1 + $0x1b8] sm:$0xff]
      %v245 = vld [vmem:[%s1 + $0x1c0] sm:$0xff]
      %v246 = vld [vmem:[%s1 + $0x1c8] sm:$0xff]
      %v247 = vld [vmem:[%s1 + $0x1d0] sm:$0xff]
      %v248 = vld [vmem:[%s1 + $0x1d8] sm:$0xff]
      %v249 = vld [vmem:[%s1 + $0x1e0] sm:$0xff]
      %v250 = vld [vmem:[%s1 + $0x1e8] sm:$0xff]
      %v251 = vld [vmem:[%s1 + $0x1f0] sm:$0xff]
      %v252 = vld [vmem:[%s1 + $0x1f8] sm:$0xff]
      %v261 = vunpack.c.l.b16 %v181
      %v262 = vunpack.c.h.b16 %v181
      %v263 = vunpack.c.l.b16 %v182
      %v264 = vunpack.c.h.b16 %v182
      %v265 = vunpack.c.l.b16 %v183
      %v266 = vunpack.c.h.b16 %v183
      %v267 = vunpack.c.l.b16 %v184
      %v268 = vunpack.c.h.b16 %v184
      %v269 = vunpack.c.l.b16 %v185
      %v270 = vunpack.c.h.b16 %v185
      %v271 = vunpack.c.l.b16 %v186
      %v272 = vunpack.c.h.b16 %v186
      %v273 = vunpack.c.l.b16 %v187
      %v274 = vunpack.c.h.b16 %v187
      %v275 = vunpack.c.l.b16 %v188
      %v276 = vunpack.c.h.b16 %v188
      %v277 = vpack.c.b16 %v263, %v261
      %v278 = vpack.c.b16 %v264, %v262
      %v279 = vpack.c.b16 %v267, %v265
      %v280 = vpack.c.b16 %v268, %v266
      %v281 = vpack.c.b16 %v271, %v269
      %v282 = vpack.c.b16 %v272, %v270
      %v283 = vpack.c.b16 %v275, %v273
      %v284 = vpack.c.b16 %v276, %v274
      %v357 = vunpack.c.l.b16 %v189
      %v358 = vunpack.c.h.b16 %v189
      %v359 = vunpack.c.l.b16 %v190
      %v360 = vunpack.c.h.b16 %v190
      %v361 = vunpack.c.l.b16 %v191
      %v362 = vunpack.c.h.b16 %v191
      %v363 = vunpack.c.l.b16 %v192
      %v364 = vunpack.c.h.b16 %v192
      %v365 = vunpack.c.l.b16 %v193
      %v366 = vunpack.c.h.b16 %v193
      %v367 = vunpack.c.l.b16 %v194
      %v368 = vunpack.c.h.b16 %v194
      %v369 = vunpack.c.l.b16 %v195
      %v370 = vunpack.c.h.b16 %v195
      %v371 = vunpack.c.l.b16 %v196
      %v372 = vunpack.c.h.b16 %v196
      %v373 = vunpack.c.l.b16 %v197
      %v374 = vunpack.c.h.b16 %v197
      %v375 = vunpack.c.l.b16 %v198
      %v376 = vunpack.c.h.b16 %v198
      %v377 = vunpack.c.l.b16 %v199
      %v378 = vunpack.c.h.b16 %v199
      %v379 = vunpack.c.l.b16 %v200
      %v380 = vunpack.c.h.b16 %v200
      %v381 = vunpack.c.l.b16 %v201
      %v382 = vunpack.c.h.b16 %v201
      %v383 = vunpack.c.l.b16 %v202
      %v384 = vunpack.c.h.b16 %v202
      %v385 = vunpack.c.l.b16 %v203
      %v386 = vunpack.c.h.b16 %v203
      %v387 = vunpack.c.l.b16 %v204
      %v388 = vunpack.c.h.b16 %v204
      %v389 = vunpack.c.l.b16 %v205
      %v390 = vunpack.c.h.b16 %v205
      %v391 = vunpack.c.l.b16 %v206
      %v392 = vunpack.c.h.b16 %v206
      %v393 = vunpack.c.l.b16 %v207
      %v394 = vunpack.c.h.b16 %v207
      %v395 = vunpack.c.l.b16 %v208
      %v396 = vunpack.c.h.b16 %v208
      %v397 = vunpack.c.l.b16 %v209
      %v398 = vunpack.c.h.b16 %v209
      %v399 = vunpack.c.l.b16 %v210
      %v400 = vunpack.c.h.b16 %v210
      %v401 = vunpack.c.l.b16 %v211
      %v402 = vunpack.c.h.b16 %v211
      %v403 = vunpack.c.l.b16 %v212
      %v404 = vunpack.c.h.b16 %v212
      %v405 = vunpack.c.l.b16 %v213
      %v406 = vunpack.c.h.b16 %v213
      %v407 = vunpack.c.l.b16 %v214
      %v408 = vunpack.c.h.b16 %v214
      %v409 = vunpack.c.l.b16 %v215
      %v410 = vunpack.c.h.b16 %v215
      %v411 = vunpack.c.l.b16 %v216
      %v412 = vunpack.c.h.b16 %v216
      %v413 = vunpack.c.l.b16 %v217
      %v414 = vunpack.c.h.b16 %v217
      %v415 = vunpack.c.l.b16 %v218
      %v416 = vunpack.c.h.b16 %v218
      %v417 = vunpack.c.l.b16 %v219
      %v418 = vunpack.c.h.b16 %v219
      %v419 = vunpack.c.l.b16 %v220
      %v420 = vunpack.c.h.b16 %v220
      %v421 = vunpack.c.l.b16 %v221
      %v422 = vunpack.c.h.b16 %v221
      %v423 = vunpack.c.l.b16 %v222
      %v424 = vunpack.c.h.b16 %v222
      %v425 = vunpack.c.l.b16 %v223
      %v426 = vunpack.c.h.b16 %v223
      %v427 = vunpack.c.l.b16 %v224
      %v428 = vunpack.c.h.b16 %v224
      %v429 = vunpack.c.l.b16 %v225
      %v430 = vunpack.c.h.b16 %v225
      %v431 = vunpack.c.l.b16 %v226
      %v432 = vunpack.c.h.b16 %v226
      %v433 = vunpack.c.l.b16 %v227
      %v434 = vunpack.c.h.b16 %v227
      %v435 = vunpack.c.l.b16 %v228
      %v436 = vunpack.c.h.b16 %v228
      %v437 = vunpack.c.l.b16 %v229
      %v438 = vunpack.c.h.b16 %v229
      %v439 = vunpack.c.l.b16 %v230
      %v440 = vunpack.c.h.b16 %v230
      %v441 = vunpack.c.l.b16 %v231
      %v442 = vunpack.c.h.b16 %v231
      %v443 = vunpack.c.l.b16 %v232
      %v444 = vunpack.c.h.b16 %v232
      %v445 = vunpack.c.l.b16 %v233
      %v446 = vunpack.c.h.b16 %v233
      %v447 = vunpack.c.l.b16 %v234
      %v448 = vunpack.c.h.b16 %v234
      %v449 = vunpack.c.l.b16 %v235
      %v450 = vunpack.c.h.b16 %v235
      %v451 = vunpack.c.l.b16 %v236
      %v452 = vunpack.c.h.b16 %v236
      %v453 = vunpack.c.l.b16 %v237
      %v454 = vunpack.c.h.b16 %v237
      %v455 = vunpack.c.l.b16 %v238
      %v456 = vunpack.c.h.b16 %v238
      %v457 = vunpack.c.l.b16 %v239
      %v458 = vunpack.c.h.b16 %v239
      %v459 = vunpack.c.l.b16 %v240
      %v460 = vunpack.c.h.b16 %v240
      %v461 = vunpack.c.l.b16 %v241
      %v462 = vunpack.c.h.b16 %v241
      %v463 = vunpack.c.l.b16 %v242
      %v464 = vunpack.c.h.b16 %v242
      %v465 = vunpack.c.l.b16 %v243
      %v466 = vunpack.c.h.b16 %v243
      %v467 = vunpack.c.l.b16 %v244
      %v468 = vunpack.c.h.b16 %v244
      %v469 = vunpack.c.l.b16 %v245
      %v470 = vunpack.c.h.b16 %v245
      %v471 = vunpack.c.l.b16 %v246
      %v472 = vunpack.c.h.b16 %v246
      %v473 = vunpack.c.l.b16 %v247
      %v474 = vunpack.c.h.b16 %v247
      %v475 = vunpack.c.l.b16 %v248
      %v476 = vunpack.c.h.b16 %v248
      %v477 = vunpack.c.l.b16 %v249
      %v478 = vunpack.c.h.b16 %v249
      %v479 = vunpack.c.l.b16 %v250
      %v480 = vunpack.c.h.b16 %v250
      %v481 = vunpack.c.l.b16 %v251
      %v482 = vunpack.c.h.b16 %v251
      %v483 = vunpack.c.l.b16 %v252
      %v484 = vunpack.c.h.b16 %v252
      %v485 = vpack.c.b16 %v361, %v357
      %v486 = vpack.c.b16 %v362, %v358
      %v487 = vpack.c.b16 %v363, %v359
      %v488 = vpack.c.b16 %v364, %v360
      %v489 = vpack.c.b16 %v369, %v365
      %v490 = vpack.c.b16 %v370, %v366
      %v491 = vpack.c.b16 %v371, %v367
      %v492 = vpack.c.b16 %v372, %v368
      %v493 = vpack.c.b16 %v377, %v373
      %v494 = vpack.c.b16 %v378, %v374
      %v495 = vpack.c.b16 %v379, %v375
      %v496 = vpack.c.b16 %v380, %v376
      %v497 = vpack.c.b16 %v385, %v381
      %v498 = vpack.c.b16 %v386, %v382
      %v499 = vpack.c.b16 %v387, %v383
      %v500 = vpack.c.b16 %v388, %v384
      %v501 = vpack.c.b16 %v393, %v389
      %v502 = vpack.c.b16 %v394, %v390
      %v503 = vpack.c.b16 %v395, %v391
      %v504 = vpack.c.b16 %v396, %v392
      %v505 = vpack.c.b16 %v401, %v397
      %v506 = vpack.c.b16 %v402, %v398
      %v507 = vpack.c.b16 %v403, %v399
      %v508 = vpack.c.b16 %v404, %v400
      %v509 = vpack.c.b16 %v409, %v405
      %v510 = vpack.c.b16 %v410, %v406
      %v511 = vpack.c.b16 %v411, %v407
      %v512 = vpack.c.b16 %v412, %v408
      %v513 = vpack.c.b16 %v417, %v413
      %v514 = vpack.c.b16 %v418, %v414
      %v515 = vpack.c.b16 %v419, %v415
      %v516 = vpack.c.b16 %v420, %v416
      %v517 = vpack.c.b16 %v425, %v421
      %v518 = vpack.c.b16 %v426, %v422
      %v519 = vpack.c.b16 %v427, %v423
      %v520 = vpack.c.b16 %v428, %v424
      %v521 = vpack.c.b16 %v433, %v429
      %v522 = vpack.c.b16 %v434, %v430
      %v523 = vpack.c.b16 %v435, %v431
      %v524 = vpack.c.b16 %v436, %v432
      %v525 = vpack.c.b16 %v441, %v437
      %v526 = vpack.c.b16 %v442, %v438
      %v527 = vpack.c.b16 %v443, %v439
      %v528 = vpack.c.b16 %v444, %v440
      %v529 = vpack.c.b16 %v449, %v445
      %v530 = vpack.c.b16 %v450, %v446
      %v531 = vpack.c.b16 %v451, %v447
      %v532 = vpack.c.b16 %v452, %v448
      %v533 = vpack.c.b16 %v457, %v453
      %v534 = vpack.c.b16 %v458, %v454
      %v535 = vpack.c.b16 %v459, %v455
      %v536 = vpack.c.b16 %v460, %v456
      %v537 = vpack.c.b16 %v465, %v461
      %v538 = vpack.c.b16 %v466, %v462
      %v539 = vpack.c.b16 %v467, %v463
      %v540 = vpack.c.b16 %v468, %v464
      %v541 = vpack.c.b16 %v473, %v469
      %v542 = vpack.c.b16 %v474, %v470
      %v543 = vpack.c.b16 %v475, %v471
      %v544 = vpack.c.b16 %v476, %v472
      %v545 = vpack.c.b16 %v481, %v477
      %v546 = vpack.c.b16 %v482, %v478
      %v547 = vpack.c.b16 %v483, %v479
      %v548 = vpack.c.b16 %v484, %v480
      %613 = vmatprep.subr.bf16.mxu0 %v514
      %614 = vmatpush1.bf16.msra.mxu0 %v513
      %615 = vmatprep.subr.bf16.mxu0 %v510
      %616 = vmatpush1.bf16.msra.mxu0 %v509
      %617 = vmatprep.subr.bf16.mxu0 %v506
      %618 = vmatpush1.bf16.msra.mxu0 %v505
      %619 = vmatprep.subr.bf16.mxu0 %v502
      %620 = vmatpush1.bf16.msra.mxu0 %v501
      %621 = vmatprep.subr.bf16.mxu0 %v498
      %622 = vmatpush1.bf16.msra.mxu0 %v497
      %623 = vmatprep.subr.bf16.mxu0 %v494
      %624 = vmatpush1.bf16.msra.mxu0 %v493
      %625 = vmatprep.subr.bf16.mxu0 %v490
      %626 = vmatpush1.bf16.msra.mxu0 %v489
      %627 = vmatprep.subr.bf16.mxu0 %v486
      %628 = vmatpush1.bf16.msra.mxu0 %v485
      %629 = vmatprep.subr.bf16.mxu0 %v546
      %630 = vmatpush2.bf16.msra.mxu0 %v545
      %631 = vmatprep.subr.bf16.mxu0 %v542
      %632 = vmatpush2.bf16.msra.mxu0 %v541
      %633 = vmatprep.subr.bf16.mxu0 %v538
      %634 = vmatpush2.bf16.msra.mxu0 %v537
      %635 = vmatprep.subr.bf16.mxu0 %v534
      %636 = vmatpush2.bf16.msra.mxu0 %v533
      %637 = vmatprep.subr.bf16.mxu0 %v530
      %638 = vmatpush2.bf16.msra.mxu0 %v529
      %639 = vmatprep.subr.bf16.mxu0 %v526
      %640 = vmatpush2.bf16.msra.mxu0 %v525
      %641 = vmatprep.subr.bf16.mxu0 %v522
      %642 = vmatpush2.bf16.msra.mxu0 %v521
      %643 = vmatprep.subr.bf16.mxu0 %v518
      %644 = vmatpush2.bf16.msra.mxu0 %v517
      %645 = vmatprep.mubr.bf16.mxu0 %v278
      %646 = vmatmul.mubr.bf16.gmra.mxu0 %v277
      %v647 = vpop.f32.mrf.mxu0
      %v648 = vadd.f32 0.0, %v647
      %v649 = vpop.f32.mrf.mxu0
      %v650 = vadd.f32 0.0, %v649
      %v651 = vpop.f32.mrf.mxu0
      %v652 = vadd.f32 0.0, %v651
      %v653 = vpop.f32.mrf.mxu0
      %v654 = vadd.f32 0.0, %v653
      %655 = vmatprep.mubr.bf16.mxu0 %v280
      %656 = vmatmul.mubr.bf16.gmra.mxu0 %v279
      %v657 = vpop.f32.mrf.mxu0
      %v658 = vadd.f32 0.0, %v657
      %v659 = vpop.f32.mrf.mxu0
      %v660 = vadd.f32 0.0, %v659
      %v661 = vpop.f32.mrf.mxu0
      %v662 = vadd.f32 0.0, %v661
      %v663 = vpop.f32.mrf.mxu0
      %v664 = vadd.f32 0.0, %v663
      %665 = vmatprep.mubr.bf16.mxu0 %v282
      %666 = vmatmul.mubr.bf16.gmra.mxu0 %v281
      %v667 = vpop.f32.mrf.mxu0
      %v668 = vadd.f32 0.0, %v667
      %v669 = vpop.f32.mrf.mxu0
      %v670 = vadd.f32 0.0, %v669
      %v671 = vpop.f32.mrf.mxu0
      %v672 = vadd.f32 0.0, %v671
      %v673 = vpop.f32.mrf.mxu0
      %v674 = vadd.f32 0.0, %v673
      %675 = vmatprep.mubr.bf16.mxu0 %v284
      %676 = vmatmul.mubr.bf16.gmra.mxu0 %v283
      %v677 = vpop.f32.mrf.mxu0
      %v678 = vadd.f32 0.0, %v677
      %v679 = vpop.f32.mrf.mxu0
      %v680 = vadd.f32 0.0, %v679
      %v681 = vpop.f32.mrf.mxu0
      %v682 = vadd.f32 0.0, %v681
      %v683 = vpop.f32.mrf.mxu0
      %v684 = vadd.f32 0.0, %v683
      %685 = vdwg.mxu0
      %686 = vmatprep.subr.bf16.mxu0 %v516
      %687 = vmatpush1.bf16.msra.mxu0 %v515
      %688 = vmatprep.subr.bf16.mxu0 %v512
      %689 = vmatpush1.bf16.msra.mxu0 %v511
      %690 = vmatprep.subr.bf16.mxu0 %v508
      %691 = vmatpush1.bf16.msra.mxu0 %v507
      %692 = vmatprep.subr.bf16.mxu0 %v504
      %693 = vmatpush1.bf16.msra.mxu0 %v503
      %694 = vmatprep.subr.bf16.mxu0 %v500
      %695 = vmatpush1.bf16.msra.mxu0 %v499
      %696 = vmatprep.subr.bf16.mxu0 %v496
      %697 = vmatpush1.bf16.msra.mxu0 %v495
      %698 = vmatprep.subr.bf16.mxu0 %v492
      %699 = vmatpush1.bf16.msra.mxu0 %v491
      %700 = vmatprep.subr.bf16.mxu0 %v488
      %701 = vmatpush1.bf16.msra.mxu0 %v487
      %702 = vmatprep.subr.bf16.mxu0 %v548
      %703 = vmatpush2.bf16.msra.mxu0 %v547
      %704 = vmatprep.subr.bf16.mxu0 %v544
      %705 = vmatpush2.bf16.msra.mxu0 %v543
      %706 = vmatprep.subr.bf16.mxu0 %v540
      %707 = vmatpush2.bf16.msra.mxu0 %v539
      %708 = vmatprep.subr.bf16.mxu0 %v536
      %709 = vmatpush2.bf16.msra.mxu0 %v535
      %710 = vmatprep.subr.bf16.mxu0 %v532
      %711 = vmatpush2.bf16.msra.mxu0 %v531
      %712 = vmatprep.subr.bf16.mxu0 %v528
      %713 = vmatpush2.bf16.msra.mxu0 %v527
      %714 = vmatprep.subr.bf16.mxu0 %v524
      %715 = vmatpush2.bf16.msra.mxu0 %v523
      %716 = vmatprep.subr.bf16.mxu0 %v520
      %717 = vmatpush2.bf16.msra.mxu0 %v519
      %718 = vmatprep.mubr.bf16.mxu0 %v278
      %719 = vmatmul.mubr.bf16.gmra.mxu0 %v277
      %v720 = vpop.f32.mrf.mxu0
      %v721 = vadd.f32 0.0, %v720
      %v722 = vpop.f32.mrf.mxu0
      %v723 = vadd.f32 0.0, %v722
      %v724 = vpop.f32.mrf.mxu0
      %v725 = vadd.f32 0.0, %v724
      %v726 = vpop.f32.mrf.mxu0
      %v727 = vadd.f32 0.0, %v726
      %728 = vmatprep.mubr.bf16.mxu0 %v280
      %729 = vmatmul.mubr.bf16.gmra.mxu0 %v279
      %v730 = vpop.f32.mrf.mxu0
      %v731 = vadd.f32 0.0, %v730
      %v732 = vpop.f32.mrf.mxu0
      %v733 = vadd.f32 0.0, %v732
      %v734 = vpop.f32.mrf.mxu0
      %v735 = vadd.f32 0.0, %v734
      %v736 = vpop.f32.mrf.mxu0
      %v737 = vadd.f32 0.0, %v736
      %738 = vmatprep.mubr.bf16.mxu0 %v282
      %739 = vmatmul.mubr.bf16.gmra.mxu0 %v281
      %v740 = vpop.f32.mrf.mxu0
      %v741 = vadd.f32 0.0, %v740
      %v742 = vpop.f32.mrf.mxu0
      %v743 = vadd.f32 0.0, %v742
      %v744 = vpop.f32.mrf.mxu0
      %v745 = vadd.f32 0.0, %v744
      %v746 = vpop.f32.mrf.mxu0
      %v747 = vadd.f32 0.0, %v746
      %748 = vmatprep.mubr.bf16.mxu0 %v284
      %749 = vmatmul.mubr.bf16.gmra.mxu0 %v283
      %v750 = vpop.f32.mrf.mxu0
      %v751 = vadd.f32 0.0, %v750
      %v752 = vpop.f32.mrf.mxu0
      %v753 = vadd.f32 0.0, %v752
      %v754 = vpop.f32.mrf.mxu0
      %v755 = vadd.f32 0.0, %v754
      %v756 = vpop.f32.mrf.mxu0
      %v757 = vadd.f32 0.0, %v756
      %758 = vdwg.mxu0
      %v759 = vmul.f32 %v648, %v648
      %v760 = vmul.f32 %v650, %v650
      %v761 = vmul.f32 %v652, %v652
      %v762 = vmul.f32 %v654, %v654
      %v763 = vmul.f32 %v658, %v658
      %v764 = vmul.f32 %v660, %v660
      %v765 = vmul.f32 %v662, %v662
      %v766 = vmul.f32 %v664, %v664
      %v767 = vmul.f32 %v668, %v668
      %v768 = vmul.f32 %v670, %v670
      %v769 = vmul.f32 %v672, %v672
      %v770 = vmul.f32 %v674, %v674
      %v771 = vmul.f32 %v678, %v678
      %v772 = vmul.f32 %v680, %v680
      %v773 = vmul.f32 %v682, %v682
      %v774 = vmul.f32 %v684, %v684
      %v775 = vmul.f32 %v721, %v721
      %v776 = vmul.f32 %v723, %v723
      %v777 = vmul.f32 %v725, %v725
      %v778 = vmul.f32 %v727, %v727
      %v779 = vmul.f32 %v731, %v731
      %v780 = vmul.f32 %v733, %v733
      %v781 = vmul.f32 %v735, %v735
      %v782 = vmul.f32 %v737, %v737
      %v783 = vmul.f32 %v741, %v741
      %v784 = vmul.f32 %v743, %v743
      %v785 = vmul.f32 %v745, %v745
      %v786 = vmul.f32 %v747, %v747
      %v787 = vmul.f32 %v751, %v751
      %v788 = vmul.f32 %v753, %v753
      %v789 = vmul.f32 %v755, %v755
      %v790 = vmul.f32 %v757, %v757
      %v791 = vadd.f32 %v759, %v775
      %v792 = vadd.f32 %v760, %v776
      %v793 = vadd.f32 %v761, %v777
      %v794 = vadd.f32 %v762, %v778
      %v795 = vadd.f32 %v763, %v779
      %v796 = vadd.f32 %v764, %v780
      %v797 = vadd.f32 %v765, %v781
      %v798 = vadd.f32 %v766, %v782
      %v799 = vadd.f32 %v767, %v783
      %v800 = vadd.f32 %v768, %v784
      %v801 = vadd.f32 %v769, %v785
      %v802 = vadd.f32 %v770, %v786
      %v803 = vadd.f32 %v771, %v787
      %v804 = vadd.f32 %v772, %v788
      %v805 = vadd.f32 %v773, %v789
      %v806 = vadd.f32 %v774, %v790
      %v807 = vmax.f32 %v791, 1.1920929e-07
      %v808 = vmax.f32 %v792, 1.1920929e-07
      %v809 = vmax.f32 %v793, 1.1920929e-07
      %v810 = vmax.f32 %v794, 1.1920929e-07
      %v811 = vmax.f32 %v795, 1.1920929e-07
      %v812 = vmax.f32 %v796, 1.1920929e-07
      %v813 = vmax.f32 %v797, 1.1920929e-07
      %v814 = vmax.f32 %v798, 1.1920929e-07
      %v815 = vmax.f32 %v799, 1.1920929e-07
      %v816 = vmax.f32 %v800, 1.1920929e-07
      %v817 = vmax.f32 %v801, 1.1920929e-07
      %v818 = vmax.f32 %v802, 1.1920929e-07
      %v819 = vmax.f32 %v803, 1.1920929e-07
      %v820 = vmax.f32 %v804, 1.1920929e-07
      %v821 = vmax.f32 %v805, 1.1920929e-07
      %v822 = vmax.f32 %v806, 1.1920929e-07
      %v823 = vrsqrt.pop %v807
      %v824 = vmul.f32 %v807, %v823
      %vm825 = vcmp.eq.f32.partialorder %v807, inf
      %v826 = vsel %vm825, %v807, %v824
      %vm827 = vcmp.eq.f32.partialorder %v807, 0.0
      %v828 = vand.u32 %v807, 2147483648
      %v829 = vsel %vm827, %v828, %v826
      %v830 = vrsqrt.pop %v808
      %v831 = vmul.f32 %v808, %v830
      %vm832 = vcmp.eq.f32.partialorder %v808, inf
      %v833 = vsel %vm832, %v808, %v831
      %vm834 = vcmp.eq.f32.partialorder %v808, 0.0
      %v835 = vand.u32 %v808, 2147483648
      %v836 = vsel %vm834, %v835, %v833
      %v837 = vrsqrt.pop %v809
      %v838 = vmul.f32 %v809, %v837
      %vm839 = vcmp.eq.f32.partialorder %v809, inf
      %v840 = vsel %vm839, %v809, %v838
      %vm841 = vcmp.eq.f32.partialorder %v809, 0.0
      %v842 = vand.u32 %v809, 2147483648
      %v843 = vsel %vm841, %v842, %v840
      %v844 = vrsqrt.pop %v810
      %v845 = vmul.f32 %v810, %v844
      %vm846 = vcmp.eq.f32.partialorder %v810, inf
      %v847 = vsel %vm846, %v810, %v845
      %vm848 = vcmp.eq.f32.partialorder %v810, 0.0
      %v849 = vand.u32 %v810, 2147483648
      %v850 = vsel %vm848, %v849, %v847
      %v851 = vrsqrt.pop %v811
      %v852 = vmul.f32 %v811, %v851
      %vm853 = vcmp.eq.f32.partialorder %v811, inf
      %v854 = vsel %vm853, %v811, %v852
      %vm855 = vcmp.eq.f32.partialorder %v811, 0.0
      %v856 = vand.u32 %v811, 2147483648
      %v857 = vsel %vm855, %v856, %v854
      %v858 = vrsqrt.pop %v812
      %v859 = vmul.f32 %v812, %v858
      %vm860 = vcmp.eq.f32.partialorder %v812, inf
      %v861 = vsel %vm860, %v812, %v859
      %vm862 = vcmp.eq.f32.partialorder %v812, 0.0
      %v863 = vand.u32 %v812, 2147483648
      %v864 = vsel %vm862, %v863, %v861
      %v865 = vrsqrt.pop %v813
      %v866 = vmul.f32 %v813, %v865
      %vm867 = vcmp.eq.f32.partialorder %v813, inf
      %v868 = vsel %vm867, %v813, %v866
      %vm869 = vcmp.eq.f32.partialorder %v813, 0.0
      %v870 = vand.u32 %v813, 2147483648
      %v871 = vsel %vm869, %v870, %v868
      %v872 = vrsqrt.pop %v814
      %v873 = vmul.f32 %v814, %v872
      %vm874 = vcmp.eq.f32.partialorder %v814, inf
      %v875 = vsel %vm874, %v814, %v873
      %vm876 = vcmp.eq.f32.partialorder %v814, 0.0
      %v877 = vand.u32 %v814, 2147483648
      %v878 = vsel %vm876, %v877, %v875
      %v879 = vrsqrt.pop %v815
      %v880 = vmul.f32 %v815, %v879
      %vm881 = vcmp.eq.f32.partialorder %v815, inf
      %v882 = vsel %vm881, %v815, %v880
      %vm883 = vcmp.eq.f32.partialorder %v815, 0.0
      %v884 = vand.u32 %v815, 2147483648
      %v885 = vsel %vm883, %v884, %v882
      %v886 = vrsqrt.pop %v816
      %v887 = vmul.f32 %v816, %v886
      %vm888 = vcmp.eq.f32.partialorder %v816, inf
      %v889 = vsel %vm888, %v816, %v887
      %vm890 = vcmp.eq.f32.partialorder %v816, 0.0
      %v891 = vand.u32 %v816, 2147483648
      %v892 = vsel %vm890, %v891, %v889
      %v893 = vrsqrt.pop %v817
      %v894 = vmul.f32 %v817, %v893
      %vm895 = vcmp.eq.f32.partialorder %v817, inf
      %v896 = vsel %vm895, %v817, %v894
      %vm897 = vcmp.eq.f32.partialorder %v817, 0.0
      %v898 = vand.u32 %v817, 2147483648
      %v899 = vsel %vm897, %v898, %v896
      %v900 = vrsqrt.pop %v818
      %v901 = vmul.f32 %v818, %v900
      %vm902 = vcmp.eq.f32.partialorder %v818, inf
      %v903 = vsel %vm902, %v818, %v901
      %vm904 = vcmp.eq.f32.partialorder %v818, 0.0
      %v905 = vand.u32 %v818, 2147483648
      %v906 = vsel %vm904, %v905, %v903
      %v907 = vrsqrt.pop %v819
      %v908 = vmul.f32 %v819, %v907
      %vm909 = vcmp.eq.f32.partialorder %v819, inf
      %v910 = vsel %vm909, %v819, %v908
      %vm911 = vcmp.eq.f32.partialorder %v819, 0.0
      %v912 = vand.u32 %v819, 2147483648
      %v913 = vsel %vm911, %v912, %v910
      %v914 = vrsqrt.pop %v820
      %v915 = vmul.f32 %v820, %v914
      %vm916 = vcmp.eq.f32.partialorder %v820, inf
      %v917 = vsel %vm916, %v820, %v915
      %vm918 = vcmp.eq.f32.partialorder %v820, 0.0
      %v919 = vand.u32 %v820, 2147483648
      %v920 = vsel %vm918, %v919, %v917
      %v921 = vrsqrt.pop %v821
      %v922 = vmul.f32 %v821, %v921
      %vm923 = vcmp.eq.f32.partialorder %v821, inf
      %v924 = vsel %vm923, %v821, %v922
      %vm925 = vcmp.eq.f32.partialorder %v821, 0.0
      %v926 = vand.u32 %v821, 2147483648
      %v927 = vsel %vm925, %v926, %v924
      %v928 = vrsqrt.pop %v822
      %v929 = vmul.f32 %v822, %v928
      %vm930 = vcmp.eq.f32.partialorder %v822, inf
      %v931 = vsel %vm930, %v822, %v929
      %vm932 = vcmp.eq.f32.partialorder %v822, 0.0
      %v933 = vand.u32 %v822, 2147483648
      %v934 = vsel %vm932, %v933, %v931
      %v935 = vadd.f32 %v829, 1.0
      %v936 = vadd.f32 %v836, 1.0
      %v937 = vadd.f32 %v843, 1.0
      %v938 = vadd.f32 %v850, 1.0
      %v939 = vadd.f32 %v857, 1.0
      %v940 = vadd.f32 %v864, 1.0
      %v941 = vadd.f32 %v871, 1.0
      %v942 = vadd.f32 %v878, 1.0
      %v943 = vadd.f32 %v885, 1.0
      %v944 = vadd.f32 %v892, 1.0
      %v945 = vadd.f32 %v899, 1.0
      %v946 = vadd.f32 %v906, 1.0
      %v947 = vadd.f32 %v913, 1.0
      %v948 = vadd.f32 %v920, 1.0
      %v949 = vadd.f32 %v927, 1.0
      %v950 = vadd.f32 %v934, 1.0
      %v951 = vlog2.pop %v935
      %v952 = vmul.f32 %v951, 0.6931472
      %v953 = vlog2.pop %v936
      %v954 = vmul.f32 %v953, 0.6931472
      %v955 = vlog2.pop %v937
      %v956 = vmul.f32 %v955, 0.6931472
      %v957 = vlog2.pop %v938
      %v958 = vmul.f32 %v957, 0.6931472
      %v959 = vlog2.pop %v939
      %v960 = vmul.f32 %v959, 0.6931472
      %v961 = vlog2.pop %v940
      %v962 = vmul.f32 %v961, 0.6931472
      %v963 = vlog2.pop %v941
      %v964 = vmul.f32 %v963, 0.6931472
      %v965 = vlog2.pop %v942
      %v966 = vmul.f32 %v965, 0.6931472
      %v967 = vlog2.pop %v943
      %v968 = vmul.f32 %v967, 0.6931472
      %v969 = vlog2.pop %v944
      %v970 = vmul.f32 %v969, 0.6931472
      %v971 = vlog2.pop %v945
      %v972 = vmul.f32 %v971, 0.6931472
      %v973 = vlog2.pop %v946
      %v974 = vmul.f32 %v973, 0.6931472
      %v975 = vlog2.pop %v947
      %v976 = vmul.f32 %v975, 0.6931472
      %v977 = vlog2.pop %v948
      %v978 = vmul.f32 %v977, 0.6931472
      %v979 = vlog2.pop %v949
      %v980 = vmul.f32 %v979, 0.6931472
      %v981 = vlog2.pop %v950
      %v982 = vmul.f32 %v981, 0.6931472
      %v983 = vsub.f32 %v952, %v968
      %v984 = vsub.f32 %v954, %v970
      %v985 = vsub.f32 %v956, %v972
      %v986 = vsub.f32 %v958, %v974
      %v987 = vsub.f32 %v960, %v976
      %v988 = vsub.f32 %v962, %v978
      %v989 = vsub.f32 %v964, %v980
      %v990 = vsub.f32 %v966, %v982
      %v991 = vmul.f32 %v983, %v983
      %v992 = vmul.f32 %v984, %v984
      %v993 = vmul.f32 %v985, %v985
      %v994 = vmul.f32 %v986, %v986
      %v995 = vmul.f32 %v987, %v987
      %v996 = vmul.f32 %v988, %v988
      %v997 = vmul.f32 %v989, %v989
      %v998 = vmul.f32 %v990, %v990
      %v999 = vadd.f32 %v991, %v992
      %v1000 = vadd.f32 %v999, %v993
      %v1001 = vadd.f32 %v1000, %v994
      %v1002 = vadd.f32 %v1001, %v995
      %v1003 = vadd.f32 %v1002, %v996
      %v1004 = vadd.f32 %v1003, %v997
      %v1005 = vadd.f32 %v1004, %v998
      %1006 = vadd.xlane.f32.xlu0 %v1005
      %v1007 = vpop.xlane.xlu0 %1006
      %v1008 = vrot.slane %v1007, 4
      %v1009 = vadd.f32 %v1007, %v1008
      %v1010 = vrot.slane %v1009, 2
      %v1011 = vadd.f32 %v1009, %v1010
      %v1012 = vrot.slane %v1011, 1
      %v1013 = vadd.f32 %v1011, %v1012
      %s1014 = vtos %v1013
      %v1015 = vstv %s1014
      %1016 = vst [vmem:[%s180] sm:$0xff] %v1015
      %p1017 = scmp.lt.s32.totalorder %s17, 1
      %s1018 = scalar_select %p1017, %s17, 1
      %p1019 = scmp.lt.s32.totalorder %s18, 0
      %s1020 = scalar_select %p1019, %s18, 0
      %s1021 = sadd.s32 %s1020, %s1018
      %s1022 = smul.addr %s1021, 8
      %s1023 = scalar_lea.vmem %s2, %s1022
      // Predicated region
      $region29: #{_per_batch_sums.1} parent=27 // pred_check
        %p1024 = pneg %p94
      $region30: #{_per_batch_sums.1} parent=27 // pred_check_branch
        %1026 = sbr.rel (%p1024) target = $region32
      $region31: #{_per_batch_sums.1} parent=27 // pred_region
        _
      $region32: #{_per_batch_sums.1} parent=27 // pred_fallthru
        _
    $region28: #{_per_batch_sums.1} parent=5 // pred_fallthru
      _
    %p1027 = scmp.le.s32.totalorder 2, %s8
    // Predicated region
    $region33: #{_per_batch_sums.1} parent=5 // pred_check
      %p1028 = pneg %p1027
    $region34: #{_per_batch_sums.1} parent=5 // pred_check_branch
      %1030 = sbr.rel (%p1028) target = $region36
    $region35: #{_per_batch_sums.1} parent=5 // pred_region
      %s1031 = ssub.s32 %s8, 2
      // Predicated region
      $region37: #{_per_batch_sums.1} parent=35 // pred_check
        %p1032 = pneg %p100
      $region38: #{_per_batch_sums.1} parent=35 // pred_check_branch
        %1034 = sbr.rel (%p1032) target = $region40
      $region39: #{_per_batch_sums.1} parent=35 // pred_region
        %p1035 = scmp.lt.s32.totalorder %s19, 1
        %s1036 = scalar_select %p1035, %s19, 1
        %p1037 = scmp.lt.s32.totalorder %s20, 0
        %s1038 = scalar_select %p1037, %s20, 0
        %s1039 = sadd.s32 %s1038, %s1036
        %s1040 = smul.addr %s1039, 8
        %s1041 = scalar_lea.vmem %s2, %s1040
      $region40: #{_per_batch_sums.1} parent=35 // pred_fallthru
        _
    $region36: #{_per_batch_sums.1} parent=5 // pred_fallthru
      _
  $region6: #{_per_batch_sums.1} parent=0 // loop_footer
    %s12 = sadd.s32 1, %s8
  $region7: #{_per_batch_sums.1} parent=0 // loop_footer_branch
    %7 = sbr.rel target = $region3
  $region8: #{_per_batch_sums.1} parent=0 // loop_exit
    _

</llo_original>
